<compile_context>
chip_gen: v7x
topology: tpu7x:2x2x1
jax: 0.10.0
libtpu: 0.0.40
codegen_flags: <defaults>
</compile_context>

<pallas_src>
import jax
import jax.numpy as jnp
from jax.experimental import pallas as pl
from jax.experimental.pallas import tpu as pltpu


def _round_up(x, m):
    return (x + m - 1) // m * m


def encoder_kernel(y_ref, w1_ref, w23_ref, b_ref, o_ref):
    h_p = w1_ref.shape[1]                 # padded hidden width (mult of 128)
    a_p = w23_ref.shape[1] - h_p          # padded output width (mult of 128)

    # Static, lane-aligned slices of the packed parameter arrays.
    w2 = w23_ref[:, 0:h_p]                # (h_p, h_p) bf16
    w3 = w23_ref[:, h_p:h_p + a_p]        # (h_p, a_p) bf16
    b1 = b_ref[:, 0:h_p]                  # (1, h_p) f32
    b2 = b_ref[:, h_p:2 * h_p]            # (1, h_p) f32
    b3 = b_ref[:, 2 * h_p:2 * h_p + a_p]  # (1, a_p) f32

    # Layer 1: Linear(y -> hidden) + ReLU   (bf16 MXU operands, f32 accumulate)
    y_bf = y_ref[...].astype(jnp.bfloat16)
    h1 = jnp.dot(y_bf, w1_ref[...], preferred_element_type=jnp.float32)
    h1 = jnp.maximum(h1 + b1, 0.0)
    # (Dropout: identity at inference)

    # Layer 2: Linear(hidden -> hidden) + ReLU
    h2 = jnp.dot(h1.astype(jnp.bfloat16), w2, preferred_element_type=jnp.float32)
    h2 = jnp.maximum(h2 + b2, 0.0)
    # (Dropout: identity at inference)

    # Layer 3: Linear(hidden -> a_dim)
    out = jnp.dot(h2.astype(jnp.bfloat16), w3, preferred_element_type=jnp.float32)
    o_ref[...] = (out + b3).astype(o_ref.dtype)


def encoder_forward(y, packed, *, batch_tile=None):
    """y: (B, y_dim) float32.  packed: dict from pack_params()."""
    B, y_dim = y.shape
    w1, w23, b = packed["w1"], packed["w23"], packed["b"]
    y_p, h_p = w1.shape
    a_p = w23.shape[1] - h_p
    a_dim = packed["a_dim"]
    assert y_dim == packed["y_dim"]

    # Pad the feature axis of y to the padded weight input width (lane-dense).
    if y_dim < y_p:
        y = jnp.pad(y, ((0, 0), (0, y_p - y_dim)))

    # Pick one big tile by default; for huge batches use 512-row tiles.
    # On v7x, pass batch_tile = round_up(B // 2, 8) to use both TensorCores.
    if batch_tile is None:
        batch_tile = min(max(_round_up(B, 8), 8), 512)
    batch_tile = _round_up(batch_tile, 8)
    B_pad = _round_up(B, batch_tile)
    if B_pad != B:
        y = jnp.pad(y, ((0, B_pad - B), (0, 0)))

    grid = (B_pad // batch_tile,)

    out = pl.pallas_call(
        encoder_kernel,
        out_shape=jax.ShapeDtypeStruct((B_pad, a_p), jnp.float32),
        grid_spec=pl.GridSpec(
            grid=grid,
            in_specs=[
                pl.BlockSpec((batch_tile, y_p), lambda i: (i, 0)),  # y tile
                pl.BlockSpec(w1.shape, lambda i: (0, 0)),           # w1   (bf16)
                pl.BlockSpec(w23.shape, lambda i: (0, 0)),          # w2|w3 (bf16)
                pl.BlockSpec(b.shape, lambda i: (0, 0)),            # biases (f32)
            ],
            out_specs=pl.BlockSpec((batch_tile, a_p), lambda i: (i, 0)),
        ),
        compiler_params=pltpu.CompilerParams(
            dimension_semantics=("parallel",),   # shards batch tiles across TCs on v7x
        ),
    )(y, w1, w23, b)

    # Strip batch / feature padding.
    return out[:B, :a_dim]


def init_params(key, y_dim, a_dim, hidden_dim=None):
    """Deterministic synthetic init mirroring the PyTorch module's shapes.
    PyTorch Linear(in, out) has weight (out, in); we store the transpose
    (in, out) and keep biases as (1, out). Returned in f32 / unpadded for the
    reference computation; pack_params() produces the kernel-side layout."""
    hidden = hidden_dim if hidden_dim is not None else 2 * y_dim
    ks = jax.random.split(key, 6)

    def lin(kw, kb, fan_in, fan_out):
        bound = 1.0 / jnp.sqrt(fan_in)
        w = jax.random.uniform(kw, (fan_in, fan_out), jnp.float32, -bound, bound)
        b = jax.random.uniform(kb, (1, fan_out), jnp.float32, -bound, bound)
        return w, b

    w1, b1 = lin(ks[0], ks[1], y_dim, hidden)
    w2, b2 = lin(ks[2], ks[3], hidden, hidden)
    w3, b3 = lin(ks[4], ks[5], hidden, a_dim)
    return {"w1": w1, "b1": b1, "w2": w2, "b2": b2, "w3": w3, "b3": b3,
            "y_dim": y_dim, "hidden": hidden, "a_dim": a_dim}


def pack_params(p):
    """Pad all feature dims up to multiples of 128 (lane-dense), cast weights
    to bf16 for the MXU, concatenate w2|w3 (same row dim) into one array and
    the three biases (kept in f32) into another."""
    y_dim, hidden, a_dim = p["y_dim"], p["hidden"], p["a_dim"]
    y_p = _round_up(y_dim, 128)
    h_p = _round_up(hidden, 128)
    a_p = _round_up(a_dim, 128)

    def pad_w(w, rows, cols):
        return jnp.pad(w, ((0, rows - w.shape[0]), (0, cols - w.shape[1])))

    def pad_b(b, cols):
        return jnp.pad(b, ((0, 0), (0, cols - b.shape[1])))

    w1 = pad_w(p["w1"], y_p, h_p).astype(jnp.bfloat16)
    w2 = pad_w(p["w2"], h_p, h_p)
    w3 = pad_w(p["w3"], h_p, a_p)
    w23 = jnp.concatenate([w2, w3], axis=1).astype(jnp.bfloat16)
    b = jnp.concatenate(
        [pad_b(p["b1"], h_p), pad_b(p["b2"], h_p), pad_b(p["b3"], a_p)], axis=1
    ).astype(jnp.float32)
    return {"w1": w1, "w23": w23, "b": b,
            "y_dim": y_dim, "hidden": hidden, "a_dim": a_dim}


def reference_forward(y, p):
    h1 = jnp.maximum(y @ p["w1"] + p["b1"], 0.0)
    h2 = jnp.maximum(h1 @ p["w2"] + p["b2"], 0.0)
    return h2 @ p["w3"] + p["b3"]


if __name__ == "__main__":
    key = jax.random.PRNGKey(0)
    k_y, k_p = jax.random.split(key)

    # Small shapes consistent with the module: batch=16 timesteps, y_dim=32,
    # hidden_dim defaults to 2*y_dim=64, a_dim=16.
    B, Y_DIM, A_DIM = 16, 32, 16
    params = init_params(k_p, Y_DIM, A_DIM)          # hidden = 64
    packed = pack_params(params)
    y = jax.random.normal(k_y, (B, Y_DIM), jnp.float32)

    out = encoder_forward(y, packed)                  # single grid step for B=16
    out = jax.block_until_ready(out)

    ref = reference_forward(y, params)                # pure f32 reference
    assert out.shape == (B, A_DIM)
    # bf16 MXU operands with f32 accumulation -> loosened tolerance vs f32 ref.
    assert jnp.allclose(out, ref, atol=2e-2, rtol=2e-2), "mismatch vs reference"

    print("KERNEL_OK")
</pallas_src>

<mosaic_0001>
module attributes {stable_mosaic.version = 11 : i64} {
  func.func @encoder_kernel(%arg0: i32, %arg1: memref<16x128xf32, #tpu.memory_space<vmem>>, %arg2: memref<128x128xbf16, #tpu.memory_space<vmem>>, %arg3: memref<128x256xbf16, #tpu.memory_space<vmem>>, %arg4: memref<1x384xf32, #tpu.memory_space<vmem>>, %arg5: memref<16x128xf32, #tpu.memory_space<vmem>>) attributes {dimension_semantics = [#tpu.dimension_semantics<parallel>], iteration_bounds = array<i64: 1>, scalar_prefetch = 0 : i64, scratch_operands = 0 : i64, tpu.core_type = #tpu.core_type<tc>, window_params = [{transform_indices = @transform_0, window_bounds = array<i64: 16, 128>}, {pipeline_mode = #tpu.pipeline_mode<synchronous>, transform_indices = @transform_1, window_bounds = array<i64: 128, 128>}, {pipeline_mode = #tpu.pipeline_mode<synchronous>, transform_indices = @transform_2, window_bounds = array<i64: 128, 256>}, {pipeline_mode = #tpu.pipeline_mode<synchronous>, transform_indices = @transform_3, window_bounds = array<i64: 1, 384>}, {transform_indices = @transform_4, window_bounds = array<i64: 16, 128>}]} {
    %c0 = arith.constant 0 : index
    %c0_0 = arith.constant 0 : index
    %0 = vector.load %arg3[%c0, %c0_0] : memref<128x256xbf16, #tpu.memory_space<vmem>>, vector<128x128xbf16>
    %c0_1 = arith.constant 0 : index
    %c128 = arith.constant 128 : index
    %1 = vector.load %arg3[%c0_1, %c128] : memref<128x256xbf16, #tpu.memory_space<vmem>>, vector<128x128xbf16>
    %c0_2 = arith.constant 0 : index
    %c0_3 = arith.constant 0 : index
    %2 = vector.load %arg4[%c0_2, %c0_3] : memref<1x384xf32, #tpu.memory_space<vmem>>, vector<1x128xf32>
    %c0_4 = arith.constant 0 : index
    %c128_5 = arith.constant 128 : index
    %3 = vector.load %arg4[%c0_4, %c128_5] : memref<1x384xf32, #tpu.memory_space<vmem>>, vector<1x128xf32>
    %c0_6 = arith.constant 0 : index
    %c256 = arith.constant 256 : index
    %4 = vector.load %arg4[%c0_6, %c256] : memref<1x384xf32, #tpu.memory_space<vmem>>, vector<1x128xf32>
    %c0_7 = arith.constant 0 : index
    %c0_8 = arith.constant 0 : index
    %5 = vector.load %arg1[%c0_7, %c0_8] : memref<16x128xf32, #tpu.memory_space<vmem>>, vector<16x128xf32>
    %6 = arith.truncf %5 : vector<16x128xf32> to vector<16x128xbf16>
    %c0_9 = arith.constant 0 : index
    %c0_10 = arith.constant 0 : index
    %7 = vector.load %arg2[%c0_9, %c0_10] : memref<128x128xbf16, #tpu.memory_space<vmem>>, vector<128x128xbf16>
    %cst = arith.constant dense<0.000000e+00> : vector<16x128xf32>
    %8 = tpu.matmul %6, %7, %cst {dimension_numbers = #tpu.dot_dimension_numbers<[1], [0], [0], [1], [0, 0, 1, 1], [], []>} : vector<16x128xbf16>, vector<128x128xbf16>, vector<16x128xf32> -> vector<16x128xf32>
    %9 = vector.broadcast %2 : vector<1x128xf32> to vector<16x128xf32>
    %10 = arith.addf %8, %9 : vector<16x128xf32>
    %cst_11 = arith.constant 0.000000e+00 : f32
    %11 = vector.broadcast %cst_11 : f32 to vector<16x128xf32>
    %12 = arith.maximumf %10, %11 : vector<16x128xf32>
    %13 = arith.truncf %12 : vector<16x128xf32> to vector<16x128xbf16>
    %cst_12 = arith.constant dense<0.000000e+00> : vector<16x128xf32>
    %14 = tpu.matmul %13, %0, %cst_12 {dimension_numbers = #tpu.dot_dimension_numbers<[1], [0], [0], [1], [0, 0, 1, 1], [], []>} : vector<16x128xbf16>, vector<128x128xbf16>, vector<16x128xf32> -> vector<16x128xf32>
    %15 = vector.broadcast %3 : vector<1x128xf32> to vector<16x128xf32>
    %16 = arith.addf %14, %15 : vector<16x128xf32>
    %cst_13 = arith.constant 0.000000e+00 : f32
    %17 = vector.broadcast %cst_13 : f32 to vector<16x128xf32>
    %18 = arith.maximumf %16, %17 : vector<16x128xf32>
    %19 = arith.truncf %18 : vector<16x128xf32> to vector<16x128xbf16>
    %cst_14 = arith.constant dense<0.000000e+00> : vector<16x128xf32>
    %20 = tpu.matmul %19, %1, %cst_14 {dimension_numbers = #tpu.dot_dimension_numbers<[1], [0], [0], [1], [0, 0, 1, 1], [], []>} : vector<16x128xbf16>, vector<128x128xbf16>, vector<16x128xf32> -> vector<16x128xf32>
    %21 = vector.broadcast %4 : vector<1x128xf32> to vector<16x128xf32>
    %22 = arith.addf %20, %21 : vector<16x128xf32>
    %c0_15 = arith.constant 0 : index
    %c0_16 = arith.constant 0 : index
    %23 = vector.load %arg5[%c0_15, %c0_16] : memref<16x128xf32, #tpu.memory_space<vmem>>, vector<16x128xf32>
    tpu.vector_store %arg5[%c0_15, %c0_16], %22 {strides = array<i32>} : memref<16x128xf32, #tpu.memory_space<vmem>>, vector<16x128xf32>,
    return
  }
  func.func @transform_0(%arg0: i32) -> (i32, i32) {
    %c0_i32 = arith.constant 0 : i32
    %c0_i32_0 = arith.constant 0 : i32
    return %arg0, %c0_i32 : i32, i32
  }
  func.func @transform_1(%arg0: i32) -> (i32, i32) {
    %c0_i32 = arith.constant 0 : i32
    %c0_i32_0 = arith.constant 0 : i32
    %c0_i32_1 = arith.constant 0 : i32
    return %c0_i32, %c0_i32_0 : i32, i32
  }
  func.func @transform_2(%arg0: i32) -> (i32, i32) {
    %c0_i32 = arith.constant 0 : i32
    %c0_i32_0 = arith.constant 0 : i32
    %c0_i32_1 = arith.constant 0 : i32
    return %c0_i32, %c0_i32_0 : i32, i32
  }
  func.func @transform_3(%arg0: i32) -> (i32, i32) {
    %c0_i32 = arith.constant 0 : i32
    %c0_i32_0 = arith.constant 0 : i32
    %c0_i32_1 = arith.constant 0 : i32
    return %c0_i32, %c0_i32_0 : i32, i32
  }
  func.func @transform_4(%arg0: i32) -> (i32, i32) {
    %c0_i32 = arith.constant 0 : i32
    %c0_i32_0 = arith.constant 0 : i32
    return %arg0, %c0_i32 : i32, i32
  }
}

</mosaic_0001>

<llo_original>
// kernel: tpu_custom_call.1
$region0: #{tpu_custom_call.1}
  #allocation0 [shape = 'u32[]', space=smem, size = 0x4, offset = 0x4, fixed_abs, tag = 'smem constant byte address 0x4 - core index']
  #allocation1 [shape = 'u32[144,128]{1,0:T(1,128)}', space=vmem, size = 0x12000, scoped, tag = 'internal scratch']
  %s0 = inlined_call_operand.hbm [shape: f32[16,128], index: 0, kind: input, shape index: {}]
  %s1 = inlined_call_operand.hbm [shape: bf16[128,128], index: 1, kind: input, shape index: {}]
  %s2 = inlined_call_operand.hbm [shape: bf16[128,256], index: 2, kind: input, shape index: {}]
  %s3 = inlined_call_operand.vmem [shape: f32[1,384], index: 3, kind: input, shape index: {}]
  %s4 = inlined_call_operand.hbm [shape: f32[16,128], index: 4, kind: output, shape index: {}]
  %s5 = sld [smem:[#allocation0]]
  $region38: #{tpu_custom_call.1} parent=0
    _
  %s7 = ssub.s32 1, %s5
  %s8 = scalar_select 0, %s7, %s5
  $region1: #{tpu_custom_call.1} parent=0
    #allocation2 [shape = 'u8[8192]{0}', space=vmem, size = 0x2000, scoped, tag = 'input window, operand 0, single buffered']
    #allocation3 [shape = 's32[1]{0}', space=sflag, size = 0x4, scoped, tag = 'scoped memory for tpu_custom_call.1']
    #allocation4 [shape = 's32[1]{0}', space=sflag, size = 0x4, scoped, tag = 'scoped memory for tpu_custom_call.1']
    #allocation5 [shape = 'u8[32768]{0}', space=vmem, size = 0x8000, scoped, tag = 'input window, operand 1, single buffered']
    #allocation6 [shape = 's32[1]{0}', space=sflag, size = 0x4, scoped, tag = 'scoped memory for tpu_custom_call.1']
    #allocation7 [shape = 'u8[65536]{0}', space=vmem, size = 0x10000, scoped, tag = 'input window, operand 2, single buffered']
    #allocation8 [shape = 'u8[8192]{0}', space=vmem, size = 0x2000, scoped, tag = 'output window, operand 0, single buffered']
    %9 = vsyncpa [#allocation3], 0
    %10 = vsyncpa [#allocation6], 0
    %11 = vsyncpa [#allocation4], 0
    // Predicated region
    $region2: #{tpu_custom_call.1} parent=1 // pred_check
      _
    $region3: #{tpu_custom_call.1} parent=1 // pred_check_branch
      %13 = sbr.rel (0) target = $region5
    $region4: #{tpu_custom_call.1} parent=1 // pred_region
      %s15 = ssub.s32 256, 256
      %16 = vsyncadd [#allocation3], %s15
      %s17 = sshll.u32 [#allocation2], 4
      %s18 = int_to_ptr.vmem [resolvable:$true] %s17
      %23 = dma.hbm_to_vmem [thread:$0]  %s0, 256, %s18, [#allocation3], 128, 128, 8
    $region5: #{tpu_custom_call.1} parent=1 // pred_fallthru
      _
    // Predicated region
    $region6: #{tpu_custom_call.1} parent=1 // pred_check
      _
    $region7: #{tpu_custom_call.1} parent=1 // pred_check_branch
      %25 = sbr.rel (0) target = $region9
    $region8: #{tpu_custom_call.1} parent=1 // pred_region
      %s27 = ssub.s32 1024, 1024
      %28 = vsyncadd [#allocation6], %s27
      %s29 = sshll.u32 [#allocation5], 4
      %s30 = int_to_ptr.vmem [resolvable:$true] %s29
      %35 = dma.hbm_to_vmem [thread:$0]  %s1, 1024, %s30, [#allocation6], 64, 64, 4
    $region9: #{tpu_custom_call.1} parent=1 // pred_fallthru
      _
    // Predicated region
    $region10: #{tpu_custom_call.1} parent=1 // pred_check
      _
    $region11: #{tpu_custom_call.1} parent=1 // pred_check_branch
      %37 = sbr.rel (0) target = $region13
    $region12: #{tpu_custom_call.1} parent=1 // pred_region
      %s39 = ssub.s32 2048, 2048
      %40 = vsyncadd [#allocation6], %s39
      %s41 = sshll.u32 [#allocation7], 4
      %s42 = int_to_ptr.vmem [resolvable:$true] %s41
      %47 = dma.hbm_to_vmem [thread:$0]  %s2, 2048, %s42, [#allocation6], 128, 128, 8
    $region13: #{tpu_custom_call.1} parent=1 // pred_fallthru
      _
    // Predicated region
    $region14: #{tpu_custom_call.1} parent=1 // pred_check
      _
    $region15: #{tpu_custom_call.1} parent=1 // pred_check_branch
      %49 = sbr.rel (0) target = $region17
    $region16: #{tpu_custom_call.1} parent=1 // pred_region
      _
    $region17: #{tpu_custom_call.1} parent=1 // pred_fallthru
      _
    // Predicated region
    $region18: #{tpu_custom_call.1} parent=1 // pred_check
      _
    $region19: #{tpu_custom_call.1} parent=1 // pred_check_branch
      %51 = sbr.rel (0) target = $region21
    $region20: #{tpu_custom_call.1} parent=1 // pred_region
      %52 = dma.done [#allocation3], 256
    $region21: #{tpu_custom_call.1} parent=1 // pred_fallthru
      _
    // Predicated region
    $region22: #{tpu_custom_call.1} parent=1 // pred_check
      _
    $region23: #{tpu_custom_call.1} parent=1 // pred_check_branch
      %54 = sbr.rel (0) target = $region25
    $region24: #{tpu_custom_call.1} parent=1 // pred_region
      %55 = dma.done [#allocation6], 1024
    $region25: #{tpu_custom_call.1} parent=1 // pred_fallthru
      _
    // Predicated region
    $region26: #{tpu_custom_call.1} parent=1 // pred_check
      _
    $region27: #{tpu_custom_call.1} parent=1 // pred_check_branch
      %57 = sbr.rel (0) target = $region29
    $region28: #{tpu_custom_call.1} parent=1 // pred_region
      %58 = dma.done [#allocation6], 2048
    $region29: #{tpu_custom_call.1} parent=1 // pred_fallthru
      _
    %v60 = vld [vmem:[#allocation7] sm:$0xf]
    %v61 = vld [vmem:[#allocation7 + $0x8] sm:$0xf]
    %v62 = vld [vmem:[#allocation7 + $0x10] sm:$0xf]
    %v63 = vld [vmem:[#allocation7 + $0x18] sm:$0xf]
    %v64 = vld [vmem:[#allocation7 + $0x20] sm:$0xf]
    %v65 = vld [vmem:[#allocation7 + $0x28] sm:$0xf]
    %v66 = vld [vmem:[#allocation7 + $0x30] sm:$0xf]
    %v67 = vld [vmem:[#allocation7 + $0x38] sm:$0xf]
    %v68 = vld [vmem:[#allocation7 + $0x40] sm:$0xf]
    %v69 = vld [vmem:[#allocation7 + $0x48] sm:$0xf]
    %v70 = vld [vmem:[#allocation7 + $0x50] sm:$0xf]
    %v71 = vld [vmem:[#allocation7 + $0x58] sm:$0xf]
    %v72 = vld [vmem:[#allocation7 + $0x60] sm:$0xf]
    %v73 = vld [vmem:[#allocation7 + $0x68] sm:$0xf]
    %v74 = vld [vmem:[#allocation7 + $0x70] sm:$0xf]
    %v75 = vld [vmem:[#allocation7 + $0x78] sm:$0xf]
    %v76 = vld [vmem:[#allocation7 + $0x4] sm:$0xf]
    %v77 = vld [vmem:[#allocation7 + $0xc] sm:$0xf]
    %v78 = vld [vmem:[#allocation7 + $0x14] sm:$0xf]
    %v79 = vld [vmem:[#allocation7 + $0x1c] sm:$0xf]
    %v80 = vld [vmem:[#allocation7 + $0x24] sm:$0xf]
    %v81 = vld [vmem:[#allocation7 + $0x2c] sm:$0xf]
    %v82 = vld [vmem:[#allocation7 + $0x34] sm:$0xf]
    %v83 = vld [vmem:[#allocation7 + $0x3c] sm:$0xf]
    %v84 = vld [vmem:[#allocation7 + $0x44] sm:$0xf]
    %v85 = vld [vmem:[#allocation7 + $0x4c] sm:$0xf]
    %v86 = vld [vmem:[#allocation7 + $0x54] sm:$0xf]
    %v87 = vld [vmem:[#allocation7 + $0x5c] sm:$0xf]
    %v88 = vld [vmem:[#allocation7 + $0x64] sm:$0xf]
    %v89 = vld [vmem:[#allocation7 + $0x6c] sm:$0xf]
    %v90 = vld [vmem:[#allocation7 + $0x74] sm:$0xf]
    %v91 = vld [vmem:[#allocation7 + $0x7c] sm:$0xf]
    %v92 = vld [vmem:[%s3] sm:$0x1]
    %v93 = vld [vmem:[%s3 + $0x1] sm:$0x1]
    %v94 = vld [vmem:[%s3 + $0x2] sm:$0x1]
    %v95 = vld [vmem:[#allocation2] sm:$0xff]
    %v96 = vld [vmem:[#allocation2 + $0x8] sm:$0xff]
    %v97 = vpack.c.bf16 %v96, %v95
    %v98 = vld [vmem:[#allocation5] sm:$0xf]
    %v99 = vld [vmem:[#allocation5 + $0x4] sm:$0xf]
    %v100 = vld [vmem:[#allocation5 + $0x8] sm:$0xf]
    %v101 = vld [vmem:[#allocation5 + $0xc] sm:$0xf]
    %v102 = vld [vmem:[#allocation5 + $0x10] sm:$0xf]
    %v103 = vld [vmem:[#allocation5 + $0x14] sm:$0xf]
    %v104 = vld [vmem:[#allocation5 + $0x18] sm:$0xf]
    %v105 = vld [vmem:[#allocation5 + $0x1c] sm:$0xf]
    %v106 = vld [vmem:[#allocation5 + $0x20] sm:$0xf]
    %v107 = vld [vmem:[#allocation5 + $0x24] sm:$0xf]
    %v108 = vld [vmem:[#allocation5 + $0x28] sm:$0xf]
    %v109 = vld [vmem:[#allocation5 + $0x2c] sm:$0xf]
    %v110 = vld [vmem:[#allocation5 + $0x30] sm:$0xf]
    %v111 = vld [vmem:[#allocation5 + $0x34] sm:$0xf]
    %v112 = vld [vmem:[#allocation5 + $0x38] sm:$0xf]
    %v113 = vld [vmem:[#allocation5 + $0x3c] sm:$0xf]
    %v115 = vlaneseq
    %v116 = vshrl.u32 %v115, 7
    %v117 = vsub.s32 0, %v116
    %v118 = vrot.slane %v92, %v117
    %v136 = vunpack.c.l.b16 %v98
    %v137 = vunpack.c.l.b16 %v99
    %v138 = vunpack.c.l.b16 %v100
    %v139 = vunpack.c.l.b16 %v101
    %v140 = vunpack.c.l.b16 %v102
    %v141 = vunpack.c.l.b16 %v103
    %v142 = vunpack.c.l.b16 %v104
    %v143 = vunpack.c.l.b16 %v105
    %v144 = vunpack.c.l.b16 %v106
    %v145 = vunpack.c.l.b16 %v107
    %v146 = vunpack.c.l.b16 %v108
    %v147 = vunpack.c.l.b16 %v109
    %v148 = vunpack.c.l.b16 %v110
    %v149 = vunpack.c.l.b16 %v111
    %v150 = vunpack.c.l.b16 %v112
    %v151 = vunpack.c.l.b16 %v113
    %v152 = vpack.c.b16 %v137, %v136
    %v153 = vpack.c.b16 %v139, %v138
    %v154 = vpack.c.b16 %v141, %v140
    %v155 = vpack.c.b16 %v143, %v142
    %v156 = vpack.c.b16 %v145, %v144
    %v157 = vpack.c.b16 %v147, %v146
    %v158 = vpack.c.b16 %v149, %v148
    %v159 = vpack.c.b16 %v151, %v150
    %168 = vmatprep.subr.bf16.mxu0 0
    %169 = vmatpush1.bf16.msra.mxu0 %v152
    %170 = vmatprep.subr.bf16.mxu0 0
    %171 = vmatpush1.bf16.msra.mxu0 %v153
    %172 = vmatprep.subr.bf16.mxu0 0
    %173 = vmatpush1.bf16.msra.mxu0 %v154
    %174 = vmatprep.subr.bf16.mxu0 0
    %175 = vmatpush1.bf16.msra.mxu0 %v155
    %176 = vmatprep.subr.bf16.mxu0 0
    %177 = vmatpush1.bf16.msra.mxu0 %v156
    %178 = vmatprep.subr.bf16.mxu0 0
    %179 = vmatpush1.bf16.msra.mxu0 %v157
    %180 = vmatprep.subr.bf16.mxu0 0
    %181 = vmatpush1.bf16.msra.mxu0 %v158
    %182 = vmatprep.subr.bf16.mxu0 0
    %183 = vmatpush1.bf16.msra.mxu0 %v159
    %184 = vmatprep.subr.bf16.mxu0 0
    %185 = vmatpush1.bf16.msra.mxu0 0
    %186 = vmatprep.subr.bf16.mxu0 0
    %187 = vmatpush1.bf16.msra.mxu0 0
    %188 = vmatprep.subr.bf16.mxu0 0
    %189 = vmatpush1.bf16.msra.mxu0 0
    %190 = vmatprep.subr.bf16.mxu0 0
    %191 = vmatpush1.bf16.msra.mxu0 0
    %192 = vmatprep.subr.bf16.mxu0 0
    %193 = vmatpush1.bf16.msra.mxu0 0
    %194 = vmatprep.subr.bf16.mxu0 0
    %195 = vmatpush1.bf16.msra.mxu0 0
    %196 = vmatprep.subr.bf16.mxu0 0
    %197 = vmatpush1.bf16.msra.mxu0 0
    %198 = vmatprep.subr.bf16.mxu0 0
    %199 = vmatpush1.bf16.msra.mxu0 0
    %200 = vmatprep.mubr.bf16.mxu0 0
    %201 = vmatmul.mubr.bf16.gmra.mrb[0].mxu0 %v97
    %v202 = vpop.f32.mrb[0].mxu0
    %v203 = vadd.f32 %v118, %v202
    %v204 = vpop.f32.mrb[0].mxu0
    %v205 = vpop.f32.mrb[0].mxu0
    %v206 = vadd.f32 %v118, %v205
    %v207 = vpop.f32.mrb[0].mxu0
    %208 = vdwg.mxu0
    %v209 = vmax.f32 %v203, 0.0
    %v210 = vmax.f32 %v206, 0.0
    %v211 = vpack.c.bf16 %v210, %v209
    %v213 = vlaneseq
    %v214 = vshrl.u32 %v213, 7
    %v215 = vsub.s32 0, %v214
    %v216 = vrot.slane %v93, %v215
    %v234 = vunpack.c.l.b16 %v60
    %v235 = vunpack.c.l.b16 %v61
    %v236 = vunpack.c.l.b16 %v62
    %v237 = vunpack.c.l.b16 %v63
    %v238 = vunpack.c.l.b16 %v64
    %v239 = vunpack.c.l.b16 %v65
    %v240 = vunpack.c.l.b16 %v66
    %v241 = vunpack.c.l.b16 %v67
    %v242 = vunpack.c.l.b16 %v68
    %v243 = vunpack.c.l.b16 %v69
    %v244 = vunpack.c.l.b16 %v70
    %v245 = vunpack.c.l.b16 %v71
    %v246 = vunpack.c.l.b16 %v72
    %v247 = vunpack.c.l.b16 %v73
    %v248 = vunpack.c.l.b16 %v74
    %v249 = vunpack.c.l.b16 %v75
    %v250 = vpack.c.b16 %v235, %v234
    %v251 = vpack.c.b16 %v237, %v236
    %v252 = vpack.c.b16 %v239, %v238
    %v253 = vpack.c.b16 %v241, %v240
    %v254 = vpack.c.b16 %v243, %v242
    %v255 = vpack.c.b16 %v245, %v244
    %v256 = vpack.c.b16 %v247, %v246
    %v257 = vpack.c.b16 %v249, %v248
    %266 = vmatprep.subr.bf16.mxu0 0
    %267 = vmatpush1.bf16.msra.mxu0 %v250
    %268 = vmatprep.subr.bf16.mxu0 0
    %269 = vmatpush1.bf16.msra.mxu0 %v251
    %270 = vmatprep.subr.bf16.mxu0 0
    %271 = vmatpush1.bf16.msra.mxu0 %v252
    %272 = vmatprep.subr.bf16.mxu0 0
    %273 = vmatpush1.bf16.msra.mxu0 %v253
    %274 = vmatprep.subr.bf16.mxu0 0
    %275 = vmatpush1.bf16.msra.mxu0 %v254
    %276 = vmatprep.subr.bf16.mxu0 0
    %277 = vmatpush1.bf16.msra.mxu0 %v255
    %278 = vmatprep.subr.bf16.mxu0 0
    %279 = vmatpush1.bf16.msra.mxu0 %v256
    %280 = vmatprep.subr.bf16.mxu0 0
    %281 = vmatpush1.bf16.msra.mxu0 %v257
    %282 = vmatprep.subr.bf16.mxu0 0
    %283 = vmatpush1.bf16.msra.mxu0 0
    %284 = vmatprep.subr.bf16.mxu0 0
    %285 = vmatpush1.bf16.msra.mxu0 0
    %286 = vmatprep.subr.bf16.mxu0 0
    %287 = vmatpush1.bf16.msra.mxu0 0
    %288 = vmatprep.subr.bf16.mxu0 0
    %289 = vmatpush1.bf16.msra.mxu0 0
    %290 = vmatprep.subr.bf16.mxu0 0
    %291 = vmatpush1.bf16.msra.mxu0 0
    %292 = vmatprep.subr.bf16.mxu0 0
    %293 = vmatpush1.bf16.msra.mxu0 0
    %294 = vmatprep.subr.bf16.mxu0 0
    %295 = vmatpush1.bf16.msra.mxu0 0
    %296 = vmatprep.subr.bf16.mxu0 0
    %297 = vmatpush1.bf16.msra.mxu0 0
    %298 = vmatprep.mubr.bf16.mxu0 0
    %299 = vmatmul.mubr.bf16.gmra.mrb[0].mxu0 %v211
    %v300 = vpop.f32.mrb[0].mxu0
    %v301 = vadd.f32 %v216, %v300
    %v302 = vpop.f32.mrb[0].mxu0
    %v303 = vpop.f32.mrb[0].mxu0
    %v304 = vadd.f32 %v216, %v303
    %v305 = vpop.f32.mrb[0].mxu0
    %306 = vdwg.mxu0
    %v307 = vmax.f32 %v301, 0.0
    %v308 = vmax.f32 %v304, 0.0
    %v309 = vpack.c.bf16 %v308, %v307
    %v311 = vlaneseq
    %v312 = vshrl.u32 %v311, 7
    %v313 = vsub.s32 0, %v312
    %v314 = vrot.slane %v94, %v313
    %v332 = vunpack.c.l.b16 %v76
    %v333 = vunpack.c.l.b16 %v77
    %v334 = vunpack.c.l.b16 %v78
    %v335 = vunpack.c.l.b16 %v79
    %v336 = vunpack.c.l.b16 %v80
    %v337 = vunpack.c.l.b16 %v81
    %v338 = vunpack.c.l.b16 %v82
    %v339 = vunpack.c.l.b16 %v83
    %v340 = vunpack.c.l.b16 %v84
    %v341 = vunpack.c.l.b16 %v85
    %v342 = vunpack.c.l.b16 %v86
    %v343 = vunpack.c.l.b16 %v87
    %v344 = vunpack.c.l.b16 %v88
    %v345 = vunpack.c.l.b16 %v89
    %v346 = vunpack.c.l.b16 %v90
    %v347 = vunpack.c.l.b16 %v91
    %v348 = vpack.c.b16 %v333, %v332
    %v349 = vpack.c.b16 %v335, %v334
    %v350 = vpack.c.b16 %v337, %v336
    %v351 = vpack.c.b16 %v339, %v338
    %v352 = vpack.c.b16 %v341, %v340
    %v353 = vpack.c.b16 %v343, %v342
    %v354 = vpack.c.b16 %v345, %v344
    %v355 = vpack.c.b16 %v347, %v346
    %364 = vmatprep.subr.bf16.mxu0 0
    %365 = vmatpush1.bf16.msra.mxu0 %v348
    %366 = vmatprep.subr.bf16.mxu0 0
    %367 = vmatpush1.bf16.msra.mxu0 %v349
    %368 = vmatprep.subr.bf16.mxu0 0
    %369 = vmatpush1.bf16.msra.mxu0 %v350
    %370 = vmatprep.subr.bf16.mxu0 0
    %371 = vmatpush1.bf16.msra.mxu0 %v351
    %372 = vmatprep.subr.bf16.mxu0 0
    %373 = vmatpush1.bf16.msra.mxu0 %v352
    %374 = vmatprep.subr.bf16.mxu0 0
    %375 = vmatpush1.bf16.msra.mxu0 %v353
    %376 = vmatprep.subr.bf16.mxu0 0
    %377 = vmatpush1.bf16.msra.mxu0 %v354
    %378 = vmatprep.subr.bf16.mxu0 0
    %379 = vmatpush1.bf16.msra.mxu0 %v355
    %380 = vmatprep.subr.bf16.mxu0 0
    %381 = vmatpush1.bf16.msra.mxu0 0
    %382 = vmatprep.subr.bf16.mxu0 0
    %383 = vmatpush1.bf16.msra.mxu0 0
    %384 = vmatprep.subr.bf16.mxu0 0
    %385 = vmatpush1.bf16.msra.mxu0 0
    %386 = vmatprep.subr.bf16.mxu0 0
    %387 = vmatpush1.bf16.msra.mxu0 0
    %388 = vmatprep.subr.bf16.mxu0 0
    %389 = vmatpush1.bf16.msra.mxu0 0
    %390 = vmatprep.subr.bf16.mxu0 0
    %391 = vmatpush1.bf16.msra.mxu0 0
    %392 = vmatprep.subr.bf16.mxu0 0
    %393 = vmatpush1.bf16.msra.mxu0 0
    %394 = vmatprep.subr.bf16.mxu0 0
    %395 = vmatpush1.bf16.msra.mxu0 0
    %396 = vmatprep.mubr.bf16.mxu0 0
    %397 = vmatmul.mubr.bf16.gmra.mrb[0].mxu0 %v309
    %v398 = vpop.f32.mrb[0].mxu0
    %v399 = vadd.f32 %v314, %v398
    %v400 = vpop.f32.mrb[0].mxu0
    %v401 = vpop.f32.mrb[0].mxu0
    %v402 = vadd.f32 %v314, %v401
    %v403 = vpop.f32.mrb[0].mxu0
    %404 = vdwg.mxu0
    %405 = vst [vmem:[#allocation8] sm:$0xff] %v399
    %406 = vst [vmem:[#allocation8 + $0x8] sm:$0xff] %v402
    // Predicated region
    $region30: #{tpu_custom_call.1} parent=1 // pred_check
      _
    $region31: #{tpu_custom_call.1} parent=1 // pred_check_branch
      %408 = sbr.rel (0) target = $region33
    $region32: #{tpu_custom_call.1} parent=1 // pred_region
      %s410 = ssub.s32 256, 256
      %411 = vsyncadd [#allocation4], %s410
      %s412 = sshll.u32 [#allocation8], 4
      %s413 = int_to_ptr.vmem [resolvable:$true] %s412
      %418 = dma.vmem_to_hbm [thread:$0]  %s413, 256, %s4, [#allocation4], 128, 128, 8
    $region33: #{tpu_custom_call.1} parent=1 // pred_fallthru
      _
    // Predicated region
    $region34: #{tpu_custom_call.1} parent=1 // pred_check
      _
    $region35: #{tpu_custom_call.1} parent=1 // pred_check_branch
      %420 = sbr.rel (0) target = $region37
    $region36: #{tpu_custom_call.1} parent=1 // pred_region
      %421 = dma.done [#allocation4], 256
    $region37: #{tpu_custom_call.1} parent=1 // pred_fallthru
      _
    %422 = vsyncpa [#allocation3], 1
    %423 = vsyncpa [#allocation6], 1
    %424 = vsyncpa [#allocation4], 1

</llo_original>
